<compile_context>
chip_gen: v6e
topology: v6e:2x2x1
jax: 0.10.0
libtpu: 0.0.40
codegen_flags: <defaults>
</compile_context>

<pallas_src>
import numpy as np
import jax
import jax.numpy as jnp
from jax.experimental import pallas as pl
from jax.experimental.pallas import tpu as pltpu

# 48 MiB: safe on v7x (64 MiB physical VMEM); v5e/v6e have 128 MiB.
_VMEM_LIMIT = 48 * 1024 * 1024


def _round_up(x, m):
    return ((x + m - 1) // m) * m


# ---------------------------------------------------------------------------
# MeshConv neighbourhood gather + symmetric functions (create_GeMM).
# x_bce: (B, C, E), gi: (B, E, 5) int32 (col 0 = the edge itself, cols 1..4 =
# neighbours, -1 = boundary / edge padding).  Returns (B, C*5, E) in
# x_bce.dtype, so on the bf16 path the blown-up tensor lives in HBM as bf16.
# K index = c*5 + k matches torch w.reshape(C_out, C_in*5).  The gather index
# is (B, E*5) -- NOT replicated across channels.
# ---------------------------------------------------------------------------
def gemm_features(x_bce, gi):
    B, C, E = x_bce.shape
    xpad = jnp.concatenate([jnp.zeros((B, C, 1), x_bce.dtype), x_bce], axis=2)
    idx = (gi.astype(jnp.int32) + 1).reshape(B, E * 5)          # -1 -> 0 (zero col)
    f = jax.vmap(lambda xb, ib: jnp.take(xb, ib, axis=1))(xpad, idx)
    f = f.reshape(B, C, E, 5)
    x0 = f[..., 0]
    x1 = f[..., 1] + f[..., 3]
    x2 = f[..., 2] + f[..., 4]
    x3 = jnp.abs(f[..., 1] - f[..., 3])
    x4 = jnp.abs(f[..., 2] - f[..., 4])
    g = jnp.stack([x0, x1, x2, x3, x4], axis=2)                 # (B, C, 5, E)
    return g.reshape(B, C * 5, E)                               # (B, K, E)


# ---------------------------------------------------------------------------
# Pallas kernel 1: up_conv MeshConv  y[b, :, tile] = w @ g[b, :, tile] + bias.
# Output dtype = compute dtype (bf16 path stores y1 as bf16: it only feeds
# the second gather/matmul), accumulation in f32.
# ---------------------------------------------------------------------------
def meshconv_pallas(g, w, b, *, te, out_dtype):
    B, K, E_pad = g.shape
    N = w.shape[0]
    assert E_pad % te == 0
    n_e = E_pad // te

    def kernel(g_ref, w_ref, b_ref, y_ref):
        yt = jnp.dot(w_ref[...], g_ref[0],
                     preferred_element_type=jnp.float32) + b_ref[...]
        y_ref[0] = yt.astype(y_ref.dtype)

    return pl.pallas_call(
        kernel,
        out_shape=jax.ShapeDtypeStruct((B, N, E_pad), out_dtype),
        grid_spec=pltpu.PrefetchScalarGridSpec(
            num_scalar_prefetch=0,
            grid=(B, n_e),
            in_specs=[pl.BlockSpec((1, K, te), lambda bi, ei: (bi, 0, ei)),
                      pl.BlockSpec((N, K), lambda bi, ei: (0, 0)),
                      pl.BlockSpec((N, 1), lambda bi, ei: (0, 0))],
            out_specs=pl.BlockSpec((1, N, te), lambda bi, ei: (bi, 0, ei)),
        ),
        compiler_params=pltpu.CompilerParams(
            dimension_semantics=("parallel", "parallel"),
            vmem_limit_bytes=_VMEM_LIMIT),
    )(g, w, b)


# ---------------------------------------------------------------------------
# Pallas kernel 2: conv1 (split-weight, concat-free) + bias + leaky_relu,
# fused with streaming InstanceNorm2d statistics AND the normalization apply.
#   yt = w_a @ g_up + w_b @ g_down + bias ; act ; stash tile in VMEM scratch
#   stream sum / sum-of-squares over the E ("arbitrary", last) axis
#   last tile: correct for edge padding analytically, normalize the whole
#   resident (N, E_pad) output block and write it.
# NOTE: the E axis must stay "arbitrary" and last; mean/rstd are only formed
# at ei == n_e-1 (output-block-resident-across-arbitrary-axis pattern).
# ---------------------------------------------------------------------------
def meshconv_leaky_instnorm_pallas(g_up, g_dn, w_a, w_b, b, *, te, e_true,
                                   leaky=0.0, eps=1e-5):
    B, Ka, E_pad = g_up.shape
    Kb = g_dn.shape[1]
    N = w_a.shape[0]
    assert E_pad % te == 0
    n_e = E_pad // te
    pad_e = E_pad - e_true
    inv_e = 1.0 / float(e_true)

    def kernel(gu_ref, gd_ref, wa_ref, wb_ref, b_ref, y_ref, y_sc, s_sc, q_sc):
        ei = pl.program_id(1)

        @pl.when(ei == 0)
        def _():
            s_sc[...] = jnp.zeros_like(s_sc)
            q_sc[...] = jnp.zeros_like(q_sc)

        yt = jnp.dot(wa_ref[...], gu_ref[0], preferred_element_type=jnp.float32)
        yt = yt + jnp.dot(wb_ref[...], gd_ref[0], preferred_element_type=jnp.float32)
        yt = yt + b_ref[...]
        yt = jnp.where(yt > 0, yt, leaky * yt)                  # leaky_relu

        y_sc[ei] = yt                                           # stash un-normalized tile

        # Unmasked streaming stats; padded columns (exactly act(bias)) are
        # subtracted analytically in the epilogue -- no per-tile iota/mask.
        s_sc[...] += jnp.sum(yt, axis=1, keepdims=True)
        q_sc[...] += jnp.sum(yt * yt, axis=1, keepdims=True)

        @pl.when(ei == n_e - 1)
        def _():
            bias = b_ref[...]
            act_b = jnp.where(bias > 0, bias, leaky * bias)     # padded-column value
            s = s_sc[...] - float(pad_e) * act_b
            q = q_sc[...] - float(pad_e) * (act_b * act_b)
            m = s * inv_e
            var = jnp.maximum(q * inv_e - m * m, 0.0)           # biased var, clamped
            r = jax.lax.rsqrt(var + eps)
            for j in range(n_e):                                # static slices only
                y_ref[0, :, j * te:(j + 1) * te] = (y_sc[j] - m) * r

    return pl.pallas_call(
        kernel,
        out_shape=jax.ShapeDtypeStruct((B, N, E_pad), jnp.float32),
        grid_spec=pltpu.PrefetchScalarGridSpec(
            num_scalar_prefetch=0,
            grid=(B, n_e),
            in_specs=[pl.BlockSpec((1, Ka, te), lambda bi, ei: (bi, 0, ei)),
                      pl.BlockSpec((1, Kb, te), lambda bi, ei: (bi, 0, ei)),
                      pl.BlockSpec((N, Ka), lambda bi, ei: (0, 0)),
                      pl.BlockSpec((N, Kb), lambda bi, ei: (0, 0)),
                      pl.BlockSpec((N, 1), lambda bi, ei: (0, 0))],
            out_specs=pl.BlockSpec((1, N, E_pad), lambda bi, ei: (bi, 0, 0)),
            scratch_shapes=[pltpu.VMEM((n_e, N, te), jnp.float32),
                            pltpu.VMEM((N, 1), jnp.float32),
                            pltpu.VMEM((N, 1), jnp.float32)],
        ),
        compiler_params=pltpu.CompilerParams(
            dimension_semantics=("parallel", "arbitrary"),
            vmem_limit_bytes=_VMEM_LIMIT),
    )(g_up, g_dn, w_a, w_b, b)


# ---------------------------------------------------------------------------
# UpConv forward (defaults: blocks=0, unroll=0, transfer_data=True, leaky=0)
# ---------------------------------------------------------------------------
# TODO(synk): MeshUnpool is not instantiated when unroll=0 (default); mesh
# unpooling is therefore not implemented here.
def upconv_forward(from_up, from_down, gi, params, leaky=0.0, eps=1e-5,
                   compute_dtype=jnp.bfloat16, te=1024):
    # from_up: (B, C_in, E, 1) NCHW, from_down: (B, C_out, E), gi: (B, E, 5)
    B, C_in, E, _ = from_up.shape
    C_out = params["w_up"].shape[0]

    # Edge (lane) tiling: te multiple of 128; pad E so it divides evenly.
    te = _round_up(min(te, _round_up(E, 128)), 128)
    E_pad = _round_up(E, te)
    pad_e = E_pad - E

    x = from_up[..., 0].astype(compute_dtype)                   # (B, C_in, E)
    fd = from_down.astype(compute_dtype)
    if pad_e:
        x = jnp.pad(x, ((0, 0), (0, 0), (0, pad_e)))
        fd = jnp.pad(fd, ((0, 0), (0, 0), (0, pad_e)))
        gi = jnp.pad(gi, ((0, 0), (0, pad_e), (0, 0)), constant_values=-1)

    w_up = params["w_up"].astype(compute_dtype)
    b_up = params["b_up"].astype(jnp.float32)
    # Split conv1's weight into the y1 slab and the from_down slab -- avoids
    # ever materializing the (B, 2*C_out, E) channel concat in HBM.
    w1 = params["w1"].reshape(C_out, 2 * C_out, 5)
    w1a = w1[:, :C_out, :].reshape(C_out, C_out * 5).astype(compute_dtype)
    w1b = w1[:, C_out:, :].reshape(C_out, C_out * 5).astype(compute_dtype)
    b1 = params["b1"].astype(jnp.float32)

    # --- up_conv: MeshConv(C_in -> C_out), no activation ---
    g0 = gemm_features(x, gi)                                   # (B, 5*C_in, E_pad)
    y1 = meshconv_pallas(g0, w_up, b_up, te=te, out_dtype=compute_dtype)

    # --- conv1 + leaky_relu + InstanceNorm2d, fused & concat-free ---
    g_up = gemm_features(y1, gi)                                # (B, 5*C_out, E_pad)
    g_dn = gemm_features(fd, gi)                                # (B, 5*C_out, E_pad)
    y = meshconv_leaky_instnorm_pallas(g_up, g_dn, w1a, w1b, b1, te=te,
                                       e_true=E, leaky=leaky, eps=eps)
    return y[:, :, :E]                                          # (B, C_out, E)


# Pure-JAX f32 reference of the same math (no Pallas) for validation.
def upconv_reference(from_up, from_down, gi, params, leaky=0.0, eps=1e-5):
    x = from_up[..., 0]                                         # (B, C_in, E)
    g0 = gemm_features(x, gi)
    y1 = jnp.einsum("nk,bke->bne", params["w_up"], g0) + params["b_up"][None]
    x1 = jnp.concatenate([y1, from_down], axis=1)
    g1 = gemm_features(x1, gi)
    y = jnp.einsum("nk,bke->bne", params["w1"], g1) + params["b1"][None]
    y = jnp.where(y > 0, y, leaky * y)
    mean = jnp.mean(y, axis=2, keepdims=True)
    var = jnp.mean(jnp.square(y - mean), axis=2, keepdims=True)
    return (y - mean) * jax.lax.rsqrt(var + eps)


if __name__ == "__main__":
    B, C_in, C_out, E = 2, 4, 8, 16
    leaky = 0.0

    key = jax.random.PRNGKey(0)
    k1, k2, k3, k4, k5, k6, k7 = jax.random.split(key, 7)

    # "Trained" parameters in torch Conv2d layout (C_out, C_in, 1, 5).
    w_up = jax.random.normal(k1, (C_out, C_in, 1, 5), jnp.float32) * 0.2
    b_up = jax.random.normal(k2, (C_out,), jnp.float32) * 0.1
    w1 = jax.random.normal(k3, (C_out, 2 * C_out, 1, 5), jnp.float32) * 0.2
    b1 = jax.random.normal(k4, (C_out,), jnp.float32) * 0.1

    params = {
        "w_up": w_up.reshape(C_out, C_in * 5),        # (N, K), K index = c_in*5 + k
        "b_up": b_up.reshape(C_out, 1),
        "w1":   w1.reshape(C_out, 2 * C_out * 5),
        "b1":   b1.reshape(C_out, 1),
    }

    # Inputs: from_up is NCHW (B, C_in, E, 1); from_down is (B, C_out, E).
    from_up = jax.random.normal(k5, (B, C_in, E, 1), jnp.float32)
    from_down = jax.random.normal(k6, (B, C_out, E), jnp.float32)

    # Synthetic mesh gemm indices: col 0 = edge id, cols 1..4 = neighbours (-1 = boundary).
    self_idx = jnp.broadcast_to(jnp.arange(E, dtype=jnp.int32)[None, :, None], (B, E, 1))
    nbrs = jax.random.randint(k7, (B, E, 4), -1, E, dtype=jnp.int32)
    gi = jnp.concatenate([self_idx, nbrs], axis=2)    # (B, E, 5)

    ref = upconv_reference(from_up, from_down, gi, params, leaky)

    # f32 compute path: tight check.
    out_f32 = upconv_forward(from_up, from_down, gi, params, leaky,
                             compute_dtype=jnp.float32)
    out_f32 = jax.block_until_ready(out_f32)
    np.testing.assert_allclose(np.asarray(out_f32), np.asarray(ref),
                               rtol=1e-3, atol=1e-3)
    assert out_f32.shape == (B, C_out, E)

    # Default bf16 path (halves HBM traffic on the gather tensors and y1):
    # loose sanity check -- outputs are instance-normalized (~unit variance).
    out = upconv_forward(from_up, from_down, gi, params, leaky)
    out = jax.block_until_ready(out)
    np.testing.assert_allclose(np.asarray(out), np.asarray(ref),
                               rtol=0.0, atol=0.25)
    assert out.shape == (B, C_out, E)

    print("KERNEL_OK")
</pallas_src>

<mosaic_0001>
module attributes {stable_mosaic.version = 11 : i64} {
  func.func @kernel(%arg0: i32, %arg1: i32, %arg2: memref<1x20x128xf32, #tpu.memory_space<vmem>>, %arg3: memref<8x20xf32, #tpu.memory_space<vmem>>, %arg4: memref<8x1xf32, #tpu.memory_space<vmem>>, %arg5: memref<1x8x128xf32, #tpu.memory_space<vmem>>) attributes {dimension_semantics = [#tpu.dimension_semantics<parallel>, #tpu.dimension_semantics<parallel>], iteration_bounds = array<i64: 2, 1>, scalar_prefetch = 0 : i64, scratch_operands = 0 : i64, tpu.core_type = #tpu.core_type<tc>, window_params = [{transform_indices = @transform_0, window_bounds = array<i64: 1, 20, 128>}, {pipeline_mode = #tpu.pipeline_mode<synchronous>, transform_indices = @transform_1, window_bounds = array<i64: 8, 20>}, {pipeline_mode = #tpu.pipeline_mode<synchronous>, transform_indices = @transform_2, window_bounds = array<i64: 8, 1>}, {transform_indices = @transform_3, window_bounds = array<i64: 1, 8, 128>}]} {
    %c0 = arith.constant 0 : index
    %c0_0 = arith.constant 0 : index
    %0 = vector.load %arg3[%c0, %c0_0] : memref<8x20xf32, #tpu.memory_space<vmem>>, vector<8x20xf32>
    %c0_1 = arith.constant 0 : index
    %c0_2 = arith.constant 0 : index
    %c0_3 = arith.constant 0 : index
    %1 = vector.load %arg2[%c0_1, %c0_2, %c0_3] : memref<1x20x128xf32, #tpu.memory_space<vmem>>, vector<1x20x128xf32>
    %2 = vector.shape_cast %1 : vector<1x20x128xf32> to vector<20x128xf32>
    %cst = arith.constant dense<0.000000e+00> : vector<8x128xf32>
    %3 = tpu.matmul %0, %2, %cst {dimension_numbers = #tpu.dot_dimension_numbers<[1], [0], [0], [1], [0, 0, 1, 1], [], []>} : vector<8x20xf32>, vector<20x128xf32>, vector<8x128xf32> -> vector<8x128xf32>
    %c0_4 = arith.constant 0 : index
    %c0_5 = arith.constant 0 : index
    %4 = vector.load %arg4[%c0_4, %c0_5] : memref<8x1xf32, #tpu.memory_space<vmem>>, vector<8x1xf32>
    %5 = vector.broadcast %4 : vector<8x1xf32> to vector<8x128xf32>
    %6 = arith.addf %3, %5 : vector<8x128xf32>
    %c0_6 = arith.constant 0 : index
    %c0_7 = arith.constant 0 : index
    %c0_8 = arith.constant 0 : index
    %7 = vector.load %arg5[%c0_6, %c0_7, %c0_8] : memref<1x8x128xf32, #tpu.memory_space<vmem>>, vector<1x8x128xf32>
    %8 = vector.shape_cast %7 : vector<1x8x128xf32> to vector<8x128xf32>
    %9 = vector.shape_cast %6 : vector<8x128xf32> to vector<1x8x128xf32>
    tpu.vector_store %arg5[%c0_6, %c0_7, %c0_8], %9 {strides = array<i32>} : memref<1x8x128xf32, #tpu.memory_space<vmem>>, vector<1x8x128xf32>,
    return
  }
  func.func @transform_0(%arg0: i32, %arg1: i32) -> (i32, i32, i32) {
    %c0_i32 = arith.constant 0 : i32
    %c0_i32_0 = arith.constant 0 : i32
    return %arg0, %c0_i32, %arg1 : i32, i32, i32
  }
  func.func @transform_1(%arg0: i32, %arg1: i32) -> (i32, i32) {
    %c0_i32 = arith.constant 0 : i32
    %c0_i32_0 = arith.constant 0 : i32
    %c0_i32_1 = arith.constant 0 : i32
    return %c0_i32, %c0_i32_0 : i32, i32
  }
  func.func @transform_2(%arg0: i32, %arg1: i32) -> (i32, i32) {
    %c0_i32 = arith.constant 0 : i32
    %c0_i32_0 = arith.constant 0 : i32
    %c0_i32_1 = arith.constant 0 : i32
    return %c0_i32, %c0_i32_0 : i32, i32
  }
  func.func @transform_3(%arg0: i32, %arg1: i32) -> (i32, i32, i32) {
    %c0_i32 = arith.constant 0 : i32
    %c0_i32_0 = arith.constant 0 : i32
    return %arg0, %c0_i32, %arg1 : i32, i32, i32
  }
}

</mosaic_0001>

<llo_original>
// kernel: tpu_custom_call.1
$region0: #{tpu_custom_call.1}
  #allocation0 [shape = 'u32[]', space=smem, size = 0x4, offset = 0x4, fixed_abs, tag = 'smem constant byte address 0x4 - core index']
  #allocation1 [shape = 'u32[144,128]{1,0:T(1,128)}', space=vmem, size = 0x12000, scoped, tag = 'internal scratch']
  %s0 = inlined_call_operand.vmem [shape: f32[2,20,128], index: 0, kind: input, shape index: {}]
  %s1 = inlined_call_operand.vmem [shape: f32[8,20], index: 1, kind: input, shape index: {}]
  %s2 = inlined_call_operand.vmem [shape: f32[8,1], index: 2, kind: input, shape index: {}]
  %s3 = inlined_call_operand.hbm [shape: f32[2,8,128], index: 3, kind: output, shape index: {}]
  %s4 = sld [smem:[#allocation0]]
  $region45: #{tpu_custom_call.1} parent=0
    _
  %s6 = ssub.s32 1, %s4
  %s7 = scalar_select 0, %s6, %s4
  $region1: #{tpu_custom_call.1} parent=0
    #allocation2 [shape = 'u8[8192]{0}', space=vmem, size = 0x2000, scoped, tag = 'output window, operand 0']
    #allocation3 [shape = 's32[2]{0}', space=sflag, size = 0x8, scoped, tag = 'scoped memory for tpu_custom_call.1']
    %8 = vsyncpa [#allocation3], 0
    %s9 = scalar_lea.sflag [#allocation3], 1
    %10 = vsyncpa %s9, 0
    loop: start=0, step=1, limit=4
    $region2: #{tpu_custom_call.1} parent=1 // loop_pre_header
      _
    $region3: #{tpu_custom_call.1} parent=1 // loop_header
      %s12 = sphi 0, %s16
      %p13 = scmp.ge.s32.totalorder %s12, 4
      %s19 = sphi 0, %s31
      %s20 = sphi 0, %s27
      %s21 = sphi 0, %s19
      %s22 = sphi 0, %s20
      %s23 = sphi 0, %s21
      %s24 = sphi 0, %s22
      %s36 = sphi 0, %s38
      %s39 = sphi 0, %s36
      %s40 = sphi 0, %s39
      %s56 = sphi 0, %s40
      %s60 = sphi 0, %s60
      %s62 = sphi 0, %s60
      %s63 = sphi 0, %s62
      %s77 = sphi 0, %s63
      %s81 = sphi 0, %s81
      %s83 = sphi 0, %s81
      %s84 = sphi 0, %s83
      %s98 = sphi 0, %s84
      %s106 = sphi 0, %s108
      %s109 = sphi 0, %s106
      %s110 = sphi 0, %s109
      %s126 = sphi 0, %s110
    $region4: #{tpu_custom_call.1} parent=1 // loop_header_branch
      %15 = sbr.rel (%p13) target = $region8
    $region5: #{tpu_custom_call.1} parent=1 // loop_body
      %s17 = ssub.s32 %s12, 1
      %s18 = ssub.s32 %s12, 2
      %s25 = sadd.s32 1, %s20
      %p26 = scmp.ge.s32.totalorder %s25, 1
      %s27 = scalar_select %p26, 0, %s25
      %s28 = sadd.s32 1, %s19
      %s29 = scalar_select %p26, %s28, %s19
      %p30 = scmp.ge.s32.totalorder %s29, 2
      %s31 = scalar_select %p30, 0, %s29
      %s32 = ssub.s32 %s19, %s31
      %s33 = ssub.s32 %s20, %s27
      %s34 = sor.u32 %s32, %s33
      %p35 = scmp.eq.s32.totalorder %s34, 0
      %s37 = sadd.s32 %s36, 1
      %s38 = scalar_select %p35, %s36, %s37
      %p41 = pneg %p35
      %p42 = scmp.eq.s32.totalorder %s12, 1
      %p43 = por %p41, %p42
      %p44 = scmp.ne.s32.totalorder %s36, %s39
      %p45 = scmp.eq.s32.totalorder %s12, 0
      %p46 = por %p44, %p45
      %p47 = scmp.ne.s32.totalorder %s36, %s39
      %p48 = scmp.eq.s32.totalorder %s17, 1
      %p49 = por %p47, %p48
      %p50 = scmp.ne.s32.totalorder %s39, %s40
      %p51 = scmp.eq.s32.totalorder %s17, 0
      %p52 = por %p50, %p51
      %p53 = scmp.ne.s32.totalorder %s39, %s40
      %p54 = scmp.eq.s32.totalorder %s18, 1
      %p55 = por %p53, %p54
      %p57 = scmp.ne.s32.totalorder %s40, %s56
      %p58 = scmp.eq.s32.totalorder %s18, 0
      %p59 = por %p57, %p58
      %s61 = sadd.s32 %s60, 1
      %p64 = scmp.eq.s32.totalorder %s12, 1
      %p65 = scmp.ne.s32.totalorder %s60, %s62
      %p66 = scmp.eq.s32.totalorder %s12, 0
      %p67 = por %p65, %p66
      %p68 = scmp.ne.s32.totalorder %s60, %s62
      %p69 = scmp.eq.s32.totalorder %s17, 1
      %p70 = por %p68, %p69
      %p71 = scmp.ne.s32.totalorder %s62, %s63
      %p72 = scmp.eq.s32.totalorder %s17, 0
      %p73 = por %p71, %p72
      %p74 = scmp.ne.s32.totalorder %s62, %s63
      %p75 = scmp.eq.s32.totalorder %s18, 1
      %p76 = por %p74, %p75
      %p78 = scmp.ne.s32.totalorder %s63, %s77
      %p79 = scmp.eq.s32.totalorder %s18, 0
      %p80 = por %p78, %p79
      %s82 = sadd.s32 %s81, 1
      %p85 = scmp.eq.s32.totalorder %s12, 1
      %p86 = scmp.ne.s32.totalorder %s81, %s83
      %p87 = scmp.eq.s32.totalorder %s12, 0
      %p88 = por %p86, %p87
      %p89 = scmp.ne.s32.totalorder %s81, %s83
      %p90 = scmp.eq.s32.totalorder %s17, 1
      %p91 = por %p89, %p90
      %p92 = scmp.ne.s32.totalorder %s83, %s84
      %p93 = scmp.eq.s32.totalorder %s17, 0
      %p94 = por %p92, %p93
      %p95 = scmp.ne.s32.totalorder %s83, %s84
      %p96 = scmp.eq.s32.totalorder %s18, 1
      %p97 = por %p95, %p96
      %p99 = scmp.ne.s32.totalorder %s84, %s98
      %p100 = scmp.eq.s32.totalorder %s18, 0
      %p101 = por %p99, %p100
      %s102 = ssub.s32 %s19, %s31
      %s103 = ssub.s32 %s20, %s27
      %s104 = sor.u32 %s102, %s103
      %p105 = scmp.eq.s32.totalorder %s104, 0
      %s107 = sadd.s32 %s106, 1
      %s108 = scalar_select %p105, %s106, %s107
      %p111 = pneg %p105
      %p112 = scmp.eq.s32.totalorder %s12, 1
      %p113 = por %p111, %p112
      %p114 = scmp.ne.s32.totalorder %s106, %s109
      %p115 = scmp.eq.s32.totalorder %s12, 0
      %p116 = por %p114, %p115
      %p117 = scmp.ne.s32.totalorder %s106, %s109
      %p118 = scmp.eq.s32.totalorder %s17, 1
      %p119 = por %p117, %p118
      %p120 = scmp.ne.s32.totalorder %s109, %s110
      %p121 = scmp.eq.s32.totalorder %s17, 0
      %p122 = por %p120, %p121
      %p123 = scmp.ne.s32.totalorder %s109, %s110
      %p124 = scmp.eq.s32.totalorder %s18, 1
      %p125 = por %p123, %p124
      %p127 = scmp.ne.s32.totalorder %s110, %s126
      %p128 = scmp.eq.s32.totalorder %s18, 0
      %p129 = por %p127, %p128
      %p130 = scmp.le.s32.totalorder 1, %s12
      %p131 = scmp.lt.s32.totalorder %s12, 3
      %p132 = pnand %p130, %p131
      %p133 = pneg %p132
      // Predicated region
      $region9: #{tpu_custom_call.1} parent=5 // pred_check
        _
      $region10: #{tpu_custom_call.1} parent=5 // pred_check_branch
        %135 = sbr.rel (%p132) target = $region12
      $region11: #{tpu_custom_call.1} parent=5 // pred_region
        %s136 = ssub.s32 %s12, 1
        // Predicated region
        $region13: #{tpu_custom_call.1} parent=11 // pred_check
          %p137 = pneg %p73
        $region14: #{tpu_custom_call.1} parent=11 // pred_check_branch
          %139 = sbr.rel (%p137) target = $region16
        $region15: #{tpu_custom_call.1} parent=11 // pred_region
          _
        $region16: #{tpu_custom_call.1} parent=11 // pred_fallthru
          _
        // Predicated region
        $region17: #{tpu_custom_call.1} parent=11 // pred_check
          %p140 = pneg %p94
        $region18: #{tpu_custom_call.1} parent=11 // pred_check_branch
          %142 = sbr.rel (%p140) target = $region20
        $region19: #{tpu_custom_call.1} parent=11 // pred_region
          _
        $region20: #{tpu_custom_call.1} parent=11 // pred_fallthru
          _
      $region12: #{tpu_custom_call.1} parent=5 // pred_fallthru
        _
      %p143 = scmp.lt.s32.totalorder %s12, 2
      // Predicated region
      $region21: #{tpu_custom_call.1} parent=5 // pred_check
        %p144 = pneg %p143
      $region22: #{tpu_custom_call.1} parent=5 // pred_check_branch
        %146 = sbr.rel (%p144) target = $region24
      $region23: #{tpu_custom_call.1} parent=5 // pred_region
        // Predicated region
        $region25: #{tpu_custom_call.1} parent=23 // pred_check
          %p147 = pneg %p46
        $region26: #{tpu_custom_call.1} parent=23 // pred_check_branch
          %149 = sbr.rel (%p147) target = $region28
        $region27: #{tpu_custom_call.1} parent=23 // pred_region
          %p150 = scmp.lt.s32.totalorder %s19, 1
          %s151 = scalar_select %p150, %s19, 1
          %p152 = scmp.lt.s32.totalorder %s20, 0
          %s153 = scalar_select %p152, %s20, 0
          %s154 = smul.addr %s151, 3
          %s155 = sadd.s32 %s153, %s154
          %s156 = smul.addr %s155, 8
          %s157 = scalar_lea.vmem %s0, %s156
        $region28: #{tpu_custom_call.1} parent=23 // pred_fallthru
          _
      $region24: #{tpu_custom_call.1} parent=5 // pred_fallthru
        _
      %p158 = scmp.le.s32.totalorder 1, %s12
      %p159 = scmp.lt.s32.totalorder %s12, 3
      %p160 = pnand %p158, %p159
      %p161 = pneg %p160
      // Predicated region
      $region29: #{tpu_custom_call.1} parent=5 // pred_check
        _
      $region30: #{tpu_custom_call.1} parent=5 // pred_check_branch
        %163 = sbr.rel (%p160) target = $region32
      $region31: #{tpu_custom_call.1} parent=5 // pred_region
        %s164 = ssub.s32 %s12, 1
        %p165 = scmp.lt.s32.totalorder %s21, 1
        %s166 = scalar_select %p165, %s21, 1
        %p167 = scmp.lt.s32.totalorder %s22, 0
        %s168 = scalar_select %p167, %s22, 0
        %s169 = smul.addr %s166, 3
        %s170 = sadd.s32 %s168, %s169
        %s171 = smul.addr %s170, 8
        %s172 = scalar_lea.vmem %s0, %s171
        %p173 = pneg %p52
        %p174 = pneg %p49
        %p175 = pneg %p73
        %p176 = pneg %p70
        %p177 = pneg %p94
        %p178 = pneg %p91
        %p179 = pneg %p122
        %p180 = pneg %p119
        %s181 = sand.u32 %s109, 1
        %s182 = scalar_lea.sflag [#allocation3], %s181
        %s183 = sand.u32 %s109, 1
        %s184 = smul.addr %s183, 8
        %s185 = scalar_lea.vmem [#allocation2], %s184
        %p186 = scmp.lt.s32.totalorder %s21, 1
        %s187 = scalar_select %p186, %s21, 1
        %p188 = scmp.lt.s32.totalorder %s22, 0
        %s189 = scalar_select %p188, %s22, 0
        %s190 = smul.addr %s187, 3
        %s191 = sadd.s32 %s189, %s190
        %s192 = smul.addr %s191, 8
        %s193 = scalar_lea.vmem %s0, %s192
        %v194 = vld [vmem:[%s1] sm:$0xff]
        %v195 = vld [vmem:[%s193] sm:$0xff]
        %v196 = vld [vmem:[%s193 + $0x8] sm:$0xff]
        %v197 = vld [vmem:[%s193 + $0x10] sm:$0xf]
        %v198 = vld [vmem:[%s2] sm:$0xff]
        %200 = vset.pattern.permute.xlu0 0
        %201 = vperm.xlu0 %200, %v198
        %v202 = vpop.permute.xlu0 %201
        %vm204 = vcmask 162816
        %v206 = vsel %vm204, %v194, 0
        %vm208 = vcmask 1043456
        %v210 = vsel %vm208, %v197, 0
        %212 = vmatprep.subr.mxu0 0.0
        %213 = vmatpush1.msra.mxu0 0.0
        %214 = vmatprep.subr.mxu0 0.0
        %215 = vmatpush1.msra.mxu0 0.0
        %216 = vmatprep.subr.mxu0 0.0
        %217 = vmatpush1.msra.mxu0 0.0
        %218 = vmatprep.subr.mxu0 0.0
        %219 = vmatpush1.msra.mxu0 0.0
        %220 = vmatprep.subr.mxu0 0.0
        %221 = vmatpush1.msra.mxu0 0.0
        %222 = vmatprep.subr.mxu0 0.0
        %223 = vmatpush1.msra.mxu0 0.0
        %224 = vmatprep.subr.mxu0 0.0
        %225 = vmatpush1.msra.mxu0 0.0
        %226 = vmatprep.subr.mxu0 0.0
        %227 = vmatpush1.msra.mxu0 0.0
        %228 = vmatprep.subr.mxu0 0.0
        %229 = vmatpush1.msra.mxu0 0.0
        %230 = vmatprep.subr.mxu0 0.0
        %231 = vmatpush1.msra.mxu0 0.0
        %232 = vmatprep.subr.mxu0 0.0
        %233 = vmatpush1.msra.mxu0 0.0
        %234 = vmatprep.subr.mxu0 0.0
        %235 = vmatpush1.msra.mxu0 0.0
        %236 = vmatprep.subr.mxu0 0.0
        %237 = vmatpush1.msra.mxu0 0.0
        %238 = vmatprep.subr.mxu0 0.0
        %239 = vmatpush1.msra.mxu0 %v210
        %240 = vmatprep.subr.mxu0 0.0
        %241 = vmatpush1.msra.mxu0 %v196
        %242 = vmatprep.subr.mxu0 0.0
        %243 = vmatpush1.msra.mxu0 %v195
        %244 = vmatprep.subr.mxu0 0.0
        %245 = vmatpush2.msra.mxu0 0.0
        %246 = vmatprep.subr.mxu0 0.0
        %247 = vmatpush2.msra.mxu0 0.0
        %248 = vmatprep.subr.mxu0 0.0
        %249 = vmatpush2.msra.mxu0 0.0
        %250 = vmatprep.subr.mxu0 0.0
        %251 = vmatpush2.msra.mxu0 0.0
        %252 = vmatprep.subr.mxu0 0.0
        %253 = vmatpush2.msra.mxu0 0.0
        %254 = vmatprep.subr.mxu0 0.0
        %255 = vmatpush2.msra.mxu0 0.0
        %256 = vmatprep.subr.mxu0 0.0
        %257 = vmatpush2.msra.mxu0 0.0
        %258 = vmatprep.subr.mxu0 0.0
        %259 = vmatpush2.msra.mxu0 0.0
        %260 = vmatprep.subr.mxu0 0.0
        %261 = vmatpush2.msra.mxu0 0.0
        %262 = vmatprep.subr.mxu0 0.0
        %263 = vmatpush2.msra.mxu0 0.0
        %264 = vmatprep.subr.mxu0 0.0
        %265 = vmatpush2.msra.mxu0 0.0
        %266 = vmatprep.subr.mxu0 0.0
        %267 = vmatpush2.msra.mxu0 0.0
        %268 = vmatprep.subr.mxu0 0.0
        %269 = vmatpush2.msra.mxu0 0.0
        %270 = vmatprep.subr.mxu0 0.0
        %271 = vmatpush2.msra.mxu0 0.0
        %272 = vmatprep.subr.mxu0 0.0
        %273 = vmatpush2.msra.mxu0 0.0
        %274 = vmatprep.subr.mxu0 0.0
        %275 = vmatpush2.msra.mxu0 0.0
        %276 = vmatprep.mubr.f32.mxu0 0.0
        %277 = vmatmul.mubr.f32.gmra.mxu0 %v206
        %v278 = vpop.f32.mrf.mxu0
        %v279 = vadd.f32 %v202, %v278
        %v280 = vpop.f32.mrf.mxu0
        %281 = vdwg.mxu0
        %282 = vst [vmem:[%s185] sm:$0xff] %v279
        %s283 = sand.u32 %s109, 1
        %s284 = scalar_lea.sflag [#allocation3], %s283
        %s285 = sand.u32 %s109, 1
        %s286 = smul.addr %s285, 8
        %s287 = scalar_lea.vmem [#allocation2], %s286
        // Predicated region
        $region33: #{tpu_custom_call.1} parent=31 // pred_check
          %p288 = pneg %p119
        $region34: #{tpu_custom_call.1} parent=31 // pred_check_branch
          %290 = sbr.rel (%p288) target = $region36
        $region35: #{tpu_custom_call.1} parent=31 // pred_region
          %s292 = ssub.s32 128, 128
          %293 = vsyncadd %s284, %s292
          %s294 = sadd.s32 %s22, %s21
          %s295 = smul.addr %s294, 128
          %s296 = scalar_lea.hbm %s3, %s295
          %s298 = sshll.u32 %s287, 4
          %s299 = int_to_ptr.vmem [resolvable:$true] %s298
          %301 = dma.vmem_to_hbm [thread:$0]  %s299, 128, %s296, %s284
        $region36: #{tpu_custom_call.1} parent=31 // pred_fallthru
          _
      $region32: #{tpu_custom_call.1} parent=5 // pred_fallthru
        _
      %p302 = scmp.le.s32.totalorder 2, %s12
      // Predicated region
      $region37: #{tpu_custom_call.1} parent=5 // pred_check
        %p303 = pneg %p302
      $region38: #{tpu_custom_call.1} parent=5 // pred_check_branch
        %305 = sbr.rel (%p303) target = $region40
      $region39: #{tpu_custom_call.1} parent=5 // pred_region
        %s306 = ssub.s32 %s12, 2
        // Predicated region
        $region41: #{tpu_custom_call.1} parent=39 // pred_check
          %p307 = pneg %p125
        $region42: #{tpu_custom_call.1} parent=39 // pred_check_branch
          %309 = sbr.rel (%p307) target = $region44
        $region43: #{tpu_custom_call.1} parent=39 // pred_region
          %s310 = sand.u32 %s110, 1
          %s311 = scalar_lea.sflag [#allocation3], %s310
          %s312 = sand.u32 %s110, 1
          %s313 = smul.addr %s312, 8
          %s314 = scalar_lea.vmem [#allocation2], %s313
          %315 = dma.done %s311, 128
        $region44: #{tpu_custom_call.1} parent=39 // pred_fallthru
          _
      $region40: #{tpu_custom_call.1} parent=5 // pred_fallthru
        _
    $region6: #{tpu_custom_call.1} parent=1 // loop_footer
      %s16 = sadd.s32 1, %s12
    $region7: #{tpu_custom_call.1} parent=1 // loop_footer_branch
      %11 = sbr.rel target = $region3
    $region8: #{tpu_custom_call.1} parent=1 // loop_exit
      _
    %316 = vsyncpa [#allocation3], 1
    %s317 = scalar_lea.sflag [#allocation3], 1
    %318 = vsyncpa %s317, 1

</llo_original>
